<compile_context>
chip_gen: v7x
topology: tpu7x:2x2x1
jax: 0.10.0
libtpu: 0.0.40
codegen_flags: <defaults>
</compile_context>

<pallas_src>
import functools

import jax
import jax.numpy as jnp
from jax.experimental import pallas as pl
from jax.experimental.pallas import tpu as pltpu


_INV_SQRT2 = 0.7071067811865476


def _round_up(x, m):
    return (x + m - 1) // m * m


def _detect_vmem_limit():
    """VMEM limit with headroom for compiler scratch (critical on v7x: 64 MiB)."""
    cap = 128 * 1024 * 1024
    try:
        info = pltpu.get_tpu_info()
        cap = int(getattr(info, "vmem_capacity_bytes", cap))
    except Exception:
        pass
    return min(100 * 1024 * 1024, int(cap * 0.80))


_VMEM_LIMIT = _detect_vmem_limit()


def _gelu_exact_f32(h):
    # exact GELU (erf formulation) -- matches torch.nn.GELU() default
    return 0.5 * h * (1.0 + jax.lax.erf(h * _INV_SQRT2))


def _mlp_kernel_f32_out(x_ref, w1_ref, b1_ref, w2_ref, b2_ref, o_ref):
    """f32 output: accumulate fc2 partials directly into the VMEM-resident output block."""
    k = pl.program_id(1)

    @pl.when(k == 0)
    def _():
        o_ref[...] = jnp.zeros_like(o_ref)

    # fc1 partial: (tm, D_in) @ (D_in, tk) -> f32 on the MXU.
    h = jnp.dot(x_ref[...], w1_ref[...], preferred_element_type=jnp.float32)
    h = _gelu_exact_f32(h + b1_ref[...])
    # fc2 partial: (tm, tk) @ (tk, D_in), accumulate into the output block.
    o_ref[...] += jnp.dot(h.astype(w2_ref.dtype), w2_ref[...],
                          preferred_element_type=jnp.float32)

    @pl.when(k == pl.num_programs(1) - 1)
    def _():
        o_ref[...] += b2_ref[...]


def _mlp_kernel_scratch(x_ref, w1_ref, b1_ref, w2_ref, b2_ref, o_ref, acc_ref):
    """Non-f32 output: accumulate in f32 scratch, cast + bias on last k step."""
    k = pl.program_id(1)

    @pl.when(k == 0)
    def _():
        acc_ref[...] = jnp.zeros_like(acc_ref)

    h = jnp.dot(x_ref[...], w1_ref[...], preferred_element_type=jnp.float32)
    h = _gelu_exact_f32(h + b1_ref[...])
    acc_ref[...] += jnp.dot(h.astype(w2_ref.dtype), w2_ref[...],
                            preferred_element_type=jnp.float32)

    @pl.when(k == pl.num_programs(1) - 1)
    def _():
        o_ref[...] = (acc_ref[...] + b2_ref[...]).astype(o_ref.dtype)


def _pick_tiles(rows, d_in_p, d_hid_p, row_tile, hid_tile, out_itemsize,
                f32_out, vmem_limit):
    # tk: largest 128-multiple <= hid_tile that divides d_hid_p (no partial blocks).
    m = d_hid_p // 128
    t_max = max(1, min(hid_tile // 128, m))
    t = 1
    for cand in range(t_max, 0, -1):
        if m % cand == 0:
            t = cand
            break
    tk = 128 * t

    # Adaptive row tile: avoid padding waste for small batches.
    if rows <= 2 * row_tile:
        tm = _round_up(rows, 8)
    else:
        tm = row_tile
    tm = max(8, tm)

    def working_set(tm_, tk_):
        bf16 = 2
        b = 2 * tm_ * d_in_p * bf16                       # x block, double-buffered
        b += 2 * d_in_p * tk_ * bf16                      # w1 block, double-buffered
        b += 2 * tk_ * d_in_p * bf16                      # w2 block, double-buffered
        b += 2 * 8 * tk_ * 4 + 2 * 8 * d_in_p * 4         # biases (sublane-padded)
        b += 2 * tm_ * d_in_p * out_itemsize              # output block, double-buffered
        if not f32_out:
            b += tm_ * d_in_p * 4                         # f32 accumulator scratch
        return b

    budget = int(vmem_limit * 0.75)
    while working_set(tm, tk) > budget and tm > 256:
        tm = _round_up(max(tm // 2, 8), 8)
    while working_set(tm, tk) > budget and tk > 128:
        nt = tk // 128 - 1
        while nt > 1 and m % nt != 0:
            nt -= 1
        tk = 128 * max(nt, 1)
    return tm, tk


def prepare_mlp_params(w1, b1, w2, b2, compute_dtype=jnp.bfloat16):
    """Pad feature dims to 128-multiples and cast to compute dtype.

    Call once at model init so the pad/cast is hoisted out of the forward path.
    Zero padding is exact: padded input features hit zero weight rows, padded
    hidden units have zero weight + zero bias (GELU(0)=0), padded output
    features get zero weight + zero bias and are sliced off after the kernel.
    """
    d_in, d_hid = w1.shape
    d_in_p = _round_up(d_in, 128)
    d_hid_p = _round_up(d_hid, 128)

    def pad2(a, s0, s1):
        if a.shape == (s0, s1):
            return a
        return jnp.pad(a, ((0, s0 - a.shape[0]), (0, s1 - a.shape[1])))

    w1p = pad2(w1, d_in_p, d_hid_p).astype(compute_dtype)
    w2p = pad2(w2, d_hid_p, d_in_p).astype(compute_dtype)
    b1p = jnp.pad(b1, (0, d_hid_p - d_hid)).astype(jnp.float32).reshape(1, d_hid_p)
    b2p = jnp.pad(b2, (0, d_in_p - d_in)).astype(jnp.float32).reshape(1, d_in_p)
    return w1p, b1p, w2p, b2p


@functools.partial(jax.jit, static_argnames=("row_tile", "hid_tile"))
def mlp_pallas_prepared(x, w1p, b1p, w2p, b2p, *, row_tile=1024, hid_tile=1024):
    """x: (B, S, D_in); padded/cast params from prepare_mlp_params."""
    orig_dtype = x.dtype
    compute_dtype = w1p.dtype

    B, S, D_in = x.shape
    d_in_p, d_hid_p = w1p.shape
    rows = B * S

    f32_out = (orig_dtype == jnp.float32)
    out_dtype = jnp.float32 if f32_out else orig_dtype
    out_itemsize = jnp.dtype(out_dtype).itemsize

    tm, tk = _pick_tiles(rows, d_in_p, d_hid_p, row_tile, hid_tile,
                         out_itemsize, f32_out, _VMEM_LIMIT)
    rows_p = _round_up(rows, tm)

    x2 = x.reshape(rows, D_in)
    if (rows_p, d_in_p) != (rows, D_in):
        x2 = jnp.pad(x2, ((0, rows_p - rows), (0, d_in_p - D_in)))
    x2 = x2.astype(compute_dtype)

    grid = (rows_p // tm, d_hid_p // tk)

    if f32_out:
        kernel = _mlp_kernel_f32_out
        scratch_shapes = []
    else:
        kernel = _mlp_kernel_scratch
        scratch_shapes = [pltpu.VMEM((tm, d_in_p), jnp.float32)]

    # Weights are re-streamed once per row tile -> account for it in the estimate.
    n_row_tiles = rows_p // tm
    w_bytes = (w1p.size + w2p.size) * jnp.dtype(compute_dtype).itemsize
    bytes_accessed = (x2.size * jnp.dtype(compute_dtype).itemsize
                      + n_row_tiles * w_bytes
                      + (b1p.size + b2p.size) * 4
                      + rows_p * d_in_p * out_itemsize)
    flops = 2 * rows_p * d_in_p * d_hid_p * 2  # two matmuls

    out = pl.pallas_call(
        kernel,
        out_shape=jax.ShapeDtypeStruct((rows_p, d_in_p), out_dtype),
        grid_spec=pltpu.PrefetchScalarGridSpec(
            num_scalar_prefetch=0,
            grid=grid,
            in_specs=[
                pl.BlockSpec((tm, d_in_p), lambda i, k: (i, 0)),   # x rows
                pl.BlockSpec((d_in_p, tk), lambda i, k: (0, k)),   # w1 hidden block
                pl.BlockSpec((1, tk),      lambda i, k: (0, k)),   # b1 hidden block
                pl.BlockSpec((tk, d_in_p), lambda i, k: (k, 0)),   # w2 hidden block
                pl.BlockSpec((1, d_in_p),  lambda i, k: (0, 0)),   # b2
            ],
            out_specs=pl.BlockSpec((tm, d_in_p), lambda i, k: (i, 0)),
            scratch_shapes=scratch_shapes,
        ),
        compiler_params=pltpu.CompilerParams(
            dimension_semantics=("parallel", "arbitrary"),
            vmem_limit_bytes=_VMEM_LIMIT,
        ),
        cost_estimate=pl.CostEstimate(
            flops=flops,
            transcendentals=rows_p * d_hid_p,
            bytes_accessed=int(bytes_accessed),
        ),
    )(x2, w1p, b1p, w2p, b2p)

    out = out[:rows, :D_in].reshape(B, S, D_in)
    if out.dtype != orig_dtype:
        out = out.astype(orig_dtype)
    return out


def mlp_pallas(x, w1, b1, w2, b2, **kwargs):
    """Convenience wrapper (per-call weight prep). Prefer preparing weights once."""
    w1p, b1p, w2p, b2p = prepare_mlp_params(w1, b1, w2, b2)
    return mlp_pallas_prepared(x, w1p, b1p, w2p, b2p, **kwargs)


def mlp_reference(x, w1, b1, w2, b2):
    h = x @ w1 + b1
    h = 0.5 * h * (1.0 + jax.lax.erf(h / jnp.sqrt(2.0)))
    return h @ w2 + b2


if __name__ == "__main__":
    key = jax.random.PRNGKey(0)

    def make_case(key, B, S, D_in, D_hid):
        kx, k1, k2, k3, k4 = jax.random.split(key, 5)
        x = jax.random.normal(kx, (B, S, D_in), dtype=jnp.float32)
        w1 = jax.random.normal(k1, (D_in, D_hid), dtype=jnp.float32) * 0.02
        b1 = jax.random.normal(k2, (D_hid,), dtype=jnp.float32) * 0.02
        w2 = jax.random.normal(k3, (D_hid, D_in), dtype=jnp.float32) * 0.02
        b2 = jax.random.normal(k4, (D_in,), dtype=jnp.float32) * 0.02
        return x, w1, b1, w2, b2

    k1, k2, k3 = jax.random.split(key, 3)

    # Case 1: small shapes, single grid step, f32 output (direct o_ref accumulation).
    x, w1, b1, w2, b2 = make_case(k1, B=2, S=8, D_in=32, D_hid=128)
    params = prepare_mlp_params(w1, b1, w2, b2)
    out = jax.block_until_ready(mlp_pallas_prepared(x, *params))
    ref = mlp_reference(x, w1, b1, w2, b2)
    assert out.shape == x.shape
    assert jnp.allclose(out, ref, atol=1e-2, rtol=1e-2), "case1 mismatch vs reference"

    # Case 2: odd token count + multiple hidden-dim grid steps (padding + reduction path).
    x, w1, b1, w2, b2 = make_case(k2, B=2, S=17, D_in=48, D_hid=320)
    out = jax.block_until_ready(mlp_pallas(x, w1, b1, w2, b2, hid_tile=128))
    ref = mlp_reference(x, w1, b1, w2, b2)
    assert out.shape == x.shape
    assert jnp.allclose(out, ref, atol=1e-2, rtol=1e-2), "case2 mismatch vs reference"

    # Case 3: bf16 activations -> exercises the f32-scratch accumulator path.
    x, w1, b1, w2, b2 = make_case(k3, B=1, S=9, D_in=32, D_hid=256)
    xb = x.astype(jnp.bfloat16)
    out = jax.block_until_ready(mlp_pallas(xb, w1, b1, w2, b2, hid_tile=128))
    ref = mlp_reference(x, w1, b1, w2, b2)
    assert out.shape == xb.shape and out.dtype == jnp.bfloat16
    assert jnp.allclose(out.astype(jnp.float32), ref, atol=3e-2, rtol=5e-2), \
        "case3 mismatch vs reference"

    print("KERNEL_OK")
</pallas_src>

<mosaic_0001>
module attributes {stable_mosaic.version = 11 : i64} {
  func.func @_mlp_kernel_f32_out(%arg0: i32, %arg1: i32, %arg2: memref<16x128xbf16, #tpu.memory_space<vmem>>, %arg3: memref<128x128xbf16, #tpu.memory_space<vmem>>, %arg4: memref<1x128xf32, #tpu.memory_space<vmem>>, %arg5: memref<128x128xbf16, #tpu.memory_space<vmem>>, %arg6: memref<1x128xf32, #tpu.memory_space<vmem>>, %arg7: memref<16x128xf32, #tpu.memory_space<vmem>>) attributes {dimension_semantics = [#tpu.dimension_semantics<parallel>, #tpu.dimension_semantics<arbitrary>], iteration_bounds = array<i64: 1, 1>, scalar_prefetch = 0 : i64, scratch_operands = 0 : i64, tpu.core_type = #tpu.core_type<tc>, window_params = [{transform_indices = @transform_0, window_bounds = array<i64: 16, 128>}, {transform_indices = @transform_1, window_bounds = array<i64: 128, 128>}, {transform_indices = @transform_2, window_bounds = array<i64: 1, 128>}, {transform_indices = @transform_3, window_bounds = array<i64: 128, 128>}, {pipeline_mode = #tpu.pipeline_mode<synchronous>, transform_indices = @transform_4, window_bounds = array<i64: 1, 128>}, {transform_indices = @transform_5, window_bounds = array<i64: 16, 128>}]} {
    %c0_i32 = arith.constant 0 : i32
    %0 = arith.cmpi eq, %arg1, %c0_i32 : i32
    %1 = arith.extui %0 : i1 to i32
    %c0_i32_0 = arith.constant 0 : i32
    %2 = arith.cmpi ne, %1, %c0_i32_0 : i32
    scf.if %2 {
      %cst_18 = arith.constant 0.000000e+00 : f32
      %26 = vector.broadcast %cst_18 : f32 to vector<16x128xf32>
      %c0_19 = arith.constant 0 : index
      %c0_20 = arith.constant 0 : index
      %27 = vector.load %arg7[%c0_19, %c0_20] : memref<16x128xf32, #tpu.memory_space<vmem>>, vector<16x128xf32>
      tpu.vector_store %arg7[%c0_19, %c0_20], %26 {strides = array<i32>} : memref<16x128xf32, #tpu.memory_space<vmem>>, vector<16x128xf32>,
    } else {
    }
    %c0 = arith.constant 0 : index
    %c0_1 = arith.constant 0 : index
    %3 = vector.load %arg2[%c0, %c0_1] : memref<16x128xbf16, #tpu.memory_space<vmem>>, vector<16x128xbf16>
    %c0_2 = arith.constant 0 : index
    %c0_3 = arith.constant 0 : index
    %4 = vector.load %arg3[%c0_2, %c0_3] : memref<128x128xbf16, #tpu.memory_space<vmem>>, vector<128x128xbf16>
    %cst = arith.constant dense<0.000000e+00> : vector<16x128xf32>
    %5 = tpu.matmul %3, %4, %cst {dimension_numbers = #tpu.dot_dimension_numbers<[1], [0], [0], [1], [0, 0, 1, 1], [], []>} : vector<16x128xbf16>, vector<128x128xbf16>, vector<16x128xf32> -> vector<16x128xf32>
    %c0_4 = arith.constant 0 : index
    %c0_5 = arith.constant 0 : index
    %6 = vector.load %arg4[%c0_4, %c0_5] : memref<1x128xf32, #tpu.memory_space<vmem>>, vector<1x128xf32>
    %7 = vector.broadcast %6 : vector<1x128xf32> to vector<16x128xf32>
    %8 = arith.addf %5, %7 : vector<16x128xf32>
    %cst_6 = arith.constant 5.000000e-01 : f32
    %9 = vector.broadcast %cst_6 : f32 to vector<16x128xf32>
    %10 = arith.mulf %9, %8 : vector<16x128xf32>
    %cst_7 = arith.constant 0.707106769 : f32
    %11 = vector.broadcast %cst_7 : f32 to vector<16x128xf32>
    %12 = arith.mulf %8, %11 : vector<16x128xf32>
    %13 = math.erf %12 : vector<16x128xf32>
    %cst_8 = arith.constant 1.000000e+00 : f32
    %14 = vector.broadcast %cst_8 : f32 to vector<16x128xf32>
    %15 = arith.addf %14, %13 : vector<16x128xf32>
    %16 = arith.mulf %10, %15 : vector<16x128xf32>
    %c0_9 = arith.constant 0 : index
    %c0_10 = arith.constant 0 : index
    %17 = vector.load %arg7[%c0_9, %c0_10] : memref<16x128xf32, #tpu.memory_space<vmem>>, vector<16x128xf32>
    %18 = arith.truncf %16 : vector<16x128xf32> to vector<16x128xbf16>
    %c0_11 = arith.constant 0 : index
    %c0_12 = arith.constant 0 : index
    %19 = vector.load %arg5[%c0_11, %c0_12] : memref<128x128xbf16, #tpu.memory_space<vmem>>, vector<128x128xbf16>
    %cst_13 = arith.constant dense<0.000000e+00> : vector<16x128xf32>
    %20 = tpu.matmul %18, %19, %cst_13 {dimension_numbers = #tpu.dot_dimension_numbers<[1], [0], [0], [1], [0, 0, 1, 1], [], []>} : vector<16x128xbf16>, vector<128x128xbf16>, vector<16x128xf32> -> vector<16x128xf32>
    %21 = arith.addf %17, %20 : vector<16x128xf32>
    %c0_14 = arith.constant 0 : index
    %c0_15 = arith.constant 0 : index
    %22 = vector.load %arg7[%c0_14, %c0_15] : memref<16x128xf32, #tpu.memory_space<vmem>>, vector<16x128xf32>
    tpu.vector_store %arg7[%c0_14, %c0_15], %21 {strides = array<i32>} : memref<16x128xf32, #tpu.memory_space<vmem>>, vector<16x128xf32>,
    %c0_i32_16 = arith.constant 0 : i32
    %23 = arith.cmpi eq, %arg1, %c0_i32_16 : i32
    %24 = arith.extui %23 : i1 to i32
    %c0_i32_17 = arith.constant 0 : i32
    %25 = arith.cmpi ne, %24, %c0_i32_17 : i32
    scf.if %25 {
      %c0_18 = arith.constant 0 : index
      %c0_19 = arith.constant 0 : index
      %26 = vector.load %arg7[%c0_18, %c0_19] : memref<16x128xf32, #tpu.memory_space<vmem>>, vector<16x128xf32>
      %c0_20 = arith.constant 0 : index
      %c0_21 = arith.constant 0 : index
      %27 = vector.load %arg6[%c0_20, %c0_21] : memref<1x128xf32, #tpu.memory_space<vmem>>, vector<1x128xf32>
      %28 = vector.broadcast %27 : vector<1x128xf32> to vector<16x128xf32>
      %29 = arith.addf %26, %28 : vector<16x128xf32>
      %c0_22 = arith.constant 0 : index
      %c0_23 = arith.constant 0 : index
      %30 = vector.load %arg7[%c0_22, %c0_23] : memref<16x128xf32, #tpu.memory_space<vmem>>, vector<16x128xf32>
      tpu.vector_store %arg7[%c0_22, %c0_23], %29 {strides = array<i32>} : memref<16x128xf32, #tpu.memory_space<vmem>>, vector<16x128xf32>,
    } else {
    }
    return
  }
  func.func @transform_0(%arg0: i32, %arg1: i32) -> (i32, i32) {
    %c0_i32 = arith.constant 0 : i32
    %c0_i32_0 = arith.constant 0 : i32
    return %arg0, %c0_i32 : i32, i32
  }
  func.func @transform_1(%arg0: i32, %arg1: i32) -> (i32, i32) {
    %c0_i32 = arith.constant 0 : i32
    %c0_i32_0 = arith.constant 0 : i32
    return %c0_i32, %arg1 : i32, i32
  }
  func.func @transform_2(%arg0: i32, %arg1: i32) -> (i32, i32) {
    %c0_i32 = arith.constant 0 : i32
    %c0_i32_0 = arith.constant 0 : i32
    return %c0_i32, %arg1 : i32, i32
  }
  func.func @transform_3(%arg0: i32, %arg1: i32) -> (i32, i32) {
    %c0_i32 = arith.constant 0 : i32
    %c0_i32_0 = arith.constant 0 : i32
    return %arg1, %c0_i32 : i32, i32
  }
  func.func @transform_4(%arg0: i32, %arg1: i32) -> (i32, i32) {
    %c0_i32 = arith.constant 0 : i32
    %c0_i32_0 = arith.constant 0 : i32
    %c0_i32_1 = arith.constant 0 : i32
    return %c0_i32, %c0_i32_0 : i32, i32
  }
  func.func @transform_5(%arg0: i32, %arg1: i32) -> (i32, i32) {
    %c0_i32 = arith.constant 0 : i32
    %c0_i32_0 = arith.constant 0 : i32
    return %arg0, %c0_i32 : i32, i32
  }
}

</mosaic_0001>

<llo_original>
// kernel: mlp_pallas_prepared.1
$region0: #{mlp_pallas_prepared.1}
  #allocation0 [shape = 'u32[]', space=smem, size = 0x4, offset = 0x4, fixed_abs, tag = 'smem constant byte address 0x4 - core index']
  #allocation1 [shape = 'u32[144,128]{1,0:T(1,128)}', space=vmem, size = 0x12000, scoped, tag = 'internal scratch']
  %s0 = inlined_call_operand.hbm [shape: bf16[16,128], index: 0, kind: input, shape index: {}]
  %s1 = inlined_call_operand.hbm [shape: bf16[128,128], index: 1, kind: input, shape index: {}]
  %s2 = inlined_call_operand.hbm [shape: f32[1,128], index: 2, kind: input, shape index: {}]
  %s3 = inlined_call_operand.hbm [shape: bf16[128,128], index: 3, kind: input, shape index: {}]
  %s4 = inlined_call_operand.hbm [shape: f32[1,128], index: 4, kind: input, shape index: {}]
  %s5 = inlined_call_operand.hbm [shape: f32[16,128], index: 5, kind: output, shape index: {}]
  %s6 = sld [smem:[#allocation0]]
  $region58: #{mlp_pallas_prepared.1} parent=0
    _
  %s8 = ssub.s32 1, %s6
  %s9 = scalar_select 0, %s8, %s6
  $region1: #{mlp_pallas_prepared.1} parent=0
    #allocation2 [shape = 'u8[4096]{0}', space=vmem, size = 0x1000, scoped, tag = 'input window, operand 0, single buffered']
    #allocation3 [shape = 's32[1]{0}', space=sflag, size = 0x4, scoped, tag = 'scoped memory for mlp_pallas_prepared.1']
    #allocation4 [shape = 's32[1]{0}', space=sflag, size = 0x4, scoped, tag = 'scoped memory for mlp_pallas_prepared.1']
    #allocation5 [shape = 'u8[32768]{0}', space=vmem, size = 0x8000, scoped, tag = 'input window, operand 1, single buffered']
    #allocation6 [shape = 's32[1]{0}', space=sflag, size = 0x4, scoped, tag = 'scoped memory for mlp_pallas_prepared.1']
    #allocation7 [shape = 'u8[512]{0}', space=vmem, size = 0x400, scoped, tag = 'input window, operand 2, single buffered']
    #allocation8 [shape = 'u8[32768]{0}', space=vmem, size = 0x8000, scoped, tag = 'input window, operand 3, single buffered']
    #allocation9 [shape = 's32[1]{0}', space=sflag, size = 0x4, scoped, tag = 'scoped memory for mlp_pallas_prepared.1']
    #allocation10 [shape = 'u8[512]{0}', space=vmem, size = 0x400, scoped, tag = 'input window, operand 4, single buffered']
    #allocation11 [shape = 'u8[8192]{0}', space=vmem, size = 0x2000, scoped, tag = 'output window, operand 0, single buffered']
    %10 = vsyncpa [#allocation3], 0
    %11 = vsyncpa [#allocation6], 0
    %12 = vsyncpa [#allocation9], 0
    %13 = vsyncpa [#allocation4], 0
    // Predicated region
    $region2: #{mlp_pallas_prepared.1} parent=1 // pred_check
      _
    $region3: #{mlp_pallas_prepared.1} parent=1 // pred_check_branch
      %15 = sbr.rel (0) target = $region5
    $region4: #{mlp_pallas_prepared.1} parent=1 // pred_region
      %s17 = ssub.s32 128, 128
      %18 = vsyncadd [#allocation3], %s17
      %s19 = sshll.u32 [#allocation2], 4
      %s20 = int_to_ptr.vmem [resolvable:$true] %s19
      %25 = dma.hbm_to_vmem [thread:$0]  %s0, 128, %s20, [#allocation3], 64, 64, 4
    $region5: #{mlp_pallas_prepared.1} parent=1 // pred_fallthru
      _
    // Predicated region
    $region6: #{mlp_pallas_prepared.1} parent=1 // pred_check
      _
    $region7: #{mlp_pallas_prepared.1} parent=1 // pred_check_branch
      %27 = sbr.rel (0) target = $region9
    $region8: #{mlp_pallas_prepared.1} parent=1 // pred_region
      %s29 = ssub.s32 1024, 1024
      %30 = vsyncadd [#allocation6], %s29
      %s31 = sshll.u32 [#allocation5], 4
      %s32 = int_to_ptr.vmem [resolvable:$true] %s31
      %37 = dma.hbm_to_vmem [thread:$0]  %s1, 1024, %s32, [#allocation6], 64, 64, 4
    $region9: #{mlp_pallas_prepared.1} parent=1 // pred_fallthru
      _
    // Predicated region
    $region10: #{mlp_pallas_prepared.1} parent=1 // pred_check
      _
    $region11: #{mlp_pallas_prepared.1} parent=1 // pred_check_branch
      %39 = sbr.rel (0) target = $region13
    $region12: #{mlp_pallas_prepared.1} parent=1 // pred_region
      %s41 = ssub.s32 16, 16
      %42 = vsyncadd [#allocation6], %s41
      %s44 = sshll.u32 [#allocation7], 4
      %s45 = int_to_ptr.vmem [resolvable:$true] %s44
      %47 = dma.hbm_to_vmem [thread:$0]  %s2, 16, %s45, [#allocation6]
    $region13: #{mlp_pallas_prepared.1} parent=1 // pred_fallthru
      _
    // Predicated region
    $region14: #{mlp_pallas_prepared.1} parent=1 // pred_check
      _
    $region15: #{mlp_pallas_prepared.1} parent=1 // pred_check_branch
      %49 = sbr.rel (0) target = $region17
    $region16: #{mlp_pallas_prepared.1} parent=1 // pred_region
      %s51 = ssub.s32 1024, 1024
      %52 = vsyncadd [#allocation9], %s51
      %s53 = sshll.u32 [#allocation8], 4
      %s54 = int_to_ptr.vmem [resolvable:$true] %s53
      %59 = dma.hbm_to_vmem [thread:$0]  %s3, 1024, %s54, [#allocation9], 64, 64, 4
    $region17: #{mlp_pallas_prepared.1} parent=1 // pred_fallthru
      _
    // Predicated region
    $region18: #{mlp_pallas_prepared.1} parent=1 // pred_check
      _
    $region19: #{mlp_pallas_prepared.1} parent=1 // pred_check_branch
      %61 = sbr.rel (0) target = $region21
    $region20: #{mlp_pallas_prepared.1} parent=1 // pred_region
      %s63 = ssub.s32 16, 16
      %64 = vsyncadd [#allocation9], %s63
      %s66 = sshll.u32 [#allocation10], 4
      %s67 = int_to_ptr.vmem [resolvable:$true] %s66
      %69 = dma.hbm_to_vmem [thread:$0]  %s4, 16, %s67, [#allocation9]
    $region21: #{mlp_pallas_prepared.1} parent=1 // pred_fallthru
      _
    // Predicated region
    $region22: #{mlp_pallas_prepared.1} parent=1 // pred_check
      _
    $region23: #{mlp_pallas_prepared.1} parent=1 // pred_check_branch
      %71 = sbr.rel (0) target = $region25
    $region24: #{mlp_pallas_prepared.1} parent=1 // pred_region
      %72 = dma.done [#allocation3], 128
    $region25: #{mlp_pallas_prepared.1} parent=1 // pred_fallthru
      _
    // Predicated region
    $region26: #{mlp_pallas_prepared.1} parent=1 // pred_check
      _
    $region27: #{mlp_pallas_prepared.1} parent=1 // pred_check_branch
      %74 = sbr.rel (0) target = $region29
    $region28: #{mlp_pallas_prepared.1} parent=1 // pred_region
      %75 = dma.done [#allocation6], 1024
    $region29: #{mlp_pallas_prepared.1} parent=1 // pred_fallthru
      _
    // Predicated region
    $region30: #{mlp_pallas_prepared.1} parent=1 // pred_check
      _
    $region31: #{mlp_pallas_prepared.1} parent=1 // pred_check_branch
      %77 = sbr.rel (0) target = $region33
    $region32: #{mlp_pallas_prepared.1} parent=1 // pred_region
      %78 = dma.done [#allocation6], 16
    $region33: #{mlp_pallas_prepared.1} parent=1 // pred_fallthru
      _
    // Predicated region
    $region34: #{mlp_pallas_prepared.1} parent=1 // pred_check
      _
    $region35: #{mlp_pallas_prepared.1} parent=1 // pred_check_branch
      %80 = sbr.rel (0) target = $region37
    $region36: #{mlp_pallas_prepared.1} parent=1 // pred_region
      %81 = dma.done [#allocation9], 1024
    $region37: #{mlp_pallas_prepared.1} parent=1 // pred_fallthru
      _
    // Predicated region
    $region38: #{mlp_pallas_prepared.1} parent=1 // pred_check
      _
    $region39: #{mlp_pallas_prepared.1} parent=1 // pred_check_branch
      %83 = sbr.rel (0) target = $region41
    $region40: #{mlp_pallas_prepared.1} parent=1 // pred_region
      %84 = dma.done [#allocation9], 16
    $region41: #{mlp_pallas_prepared.1} parent=1 // pred_fallthru
      _
    %p86 = scmp.eq.s32.totalorder 0, 0
    // Predicated region
    $region42: #{mlp_pallas_prepared.1} parent=1 // pred_check
      %p87 = pneg %p86
    $region43: #{mlp_pallas_prepared.1} parent=1 // pred_check_branch
      %89 = sbr.rel (%p87) target = $region45
    $region44: #{mlp_pallas_prepared.1} parent=1 // pred_region
      %90 = vst [vmem:[#allocation11] sm:$0xff] 0.0
      %91 = vst [vmem:[#allocation11 + $0x8] sm:$0xff] 0.0
    $region45: #{mlp_pallas_prepared.1} parent=1 // pred_fallthru
      _
    %v92 = vld [vmem:[#allocation2] sm:$0xf]
    %v93 = vld [vmem:[#allocation2 + $0x4] sm:$0xf]
    %v94 = vld [vmem:[#allocation5] sm:$0xf]
    %v95 = vld [vmem:[#allocation5 + $0x4] sm:$0xf]
    %v96 = vld [vmem:[#allocation5 + $0x8] sm:$0xf]
    %v97 = vld [vmem:[#allocation5 + $0xc] sm:$0xf]
    %v98 = vld [vmem:[#allocation5 + $0x10] sm:$0xf]
    %v99 = vld [vmem:[#allocation5 + $0x14] sm:$0xf]
    %v100 = vld [vmem:[#allocation5 + $0x18] sm:$0xf]
    %v101 = vld [vmem:[#allocation5 + $0x1c] sm:$0xf]
    %v102 = vld [vmem:[#allocation5 + $0x20] sm:$0xf]
    %v103 = vld [vmem:[#allocation5 + $0x24] sm:$0xf]
    %v104 = vld [vmem:[#allocation5 + $0x28] sm:$0xf]
    %v105 = vld [vmem:[#allocation5 + $0x2c] sm:$0xf]
    %v106 = vld [vmem:[#allocation5 + $0x30] sm:$0xf]
    %v107 = vld [vmem:[#allocation5 + $0x34] sm:$0xf]
    %v108 = vld [vmem:[#allocation5 + $0x38] sm:$0xf]
    %v109 = vld [vmem:[#allocation5 + $0x3c] sm:$0xf]
    %v110 = vld [vmem:[#allocation7] sm:$0x1]
    %v112 = vlaneseq
    %v113 = vshrl.u32 %v112, 7
    %v114 = vsub.s32 0, %v113
    %v115 = vrot.slane %v110, %v114
    %v119 = vunpack.c.l.b16 %v92
    %v120 = vunpack.c.l.b16 %v93
    %v121 = vpack.c.b16 %v120, %v119
    %v139 = vunpack.c.l.b16 %v94
    %v140 = vunpack.c.l.b16 %v95
    %v141 = vunpack.c.l.b16 %v96
    %v142 = vunpack.c.l.b16 %v97
    %v143 = vunpack.c.l.b16 %v98
    %v144 = vunpack.c.l.b16 %v99
    %v145 = vunpack.c.l.b16 %v100
    %v146 = vunpack.c.l.b16 %v101
    %v147 = vunpack.c.l.b16 %v102
    %v148 = vunpack.c.l.b16 %v103
    %v149 = vunpack.c.l.b16 %v104
    %v150 = vunpack.c.l.b16 %v105
    %v151 = vunpack.c.l.b16 %v106
    %v152 = vunpack.c.l.b16 %v107
    %v153 = vunpack.c.l.b16 %v108
    %v154 = vunpack.c.l.b16 %v109
    %v155 = vpack.c.b16 %v140, %v139
    %v156 = vpack.c.b16 %v142, %v141
    %v157 = vpack.c.b16 %v144, %v143
    %v158 = vpack.c.b16 %v146, %v145
    %v159 = vpack.c.b16 %v148, %v147
    %v160 = vpack.c.b16 %v150, %v149
    %v161 = vpack.c.b16 %v152, %v151
    %v162 = vpack.c.b16 %v154, %v153
    %171 = vmatprep.subr.bf16.mxu0 0
    %172 = vmatpush1.bf16.msra.mxu0 %v155
    %173 = vmatprep.subr.bf16.mxu0 0
    %174 = vmatpush1.bf16.msra.mxu0 %v156
    %175 = vmatprep.subr.bf16.mxu0 0
    %176 = vmatpush1.bf16.msra.mxu0 %v157
    %177 = vmatprep.subr.bf16.mxu0 0
    %178 = vmatpush1.bf16.msra.mxu0 %v158
    %179 = vmatprep.subr.bf16.mxu0 0
    %180 = vmatpush1.bf16.msra.mxu0 %v159
    %181 = vmatprep.subr.bf16.mxu0 0
    %182 = vmatpush1.bf16.msra.mxu0 %v160
    %183 = vmatprep.subr.bf16.mxu0 0
    %184 = vmatpush1.bf16.msra.mxu0 %v161
    %185 = vmatprep.subr.bf16.mxu0 0
    %186 = vmatpush1.bf16.msra.mxu0 %v162
    %187 = vmatprep.subr.bf16.mxu0 0
    %188 = vmatpush1.bf16.msra.mxu0 0
    %189 = vmatprep.subr.bf16.mxu0 0
    %190 = vmatpush1.bf16.msra.mxu0 0
    %191 = vmatprep.subr.bf16.mxu0 0
    %192 = vmatpush1.bf16.msra.mxu0 0
    %193 = vmatprep.subr.bf16.mxu0 0
    %194 = vmatpush1.bf16.msra.mxu0 0
    %195 = vmatprep.subr.bf16.mxu0 0
    %196 = vmatpush1.bf16.msra.mxu0 0
    %197 = vmatprep.subr.bf16.mxu0 0
    %198 = vmatpush1.bf16.msra.mxu0 0
    %199 = vmatprep.subr.bf16.mxu0 0
    %200 = vmatpush1.bf16.msra.mxu0 0
    %201 = vmatprep.subr.bf16.mxu0 0
    %202 = vmatpush1.bf16.msra.mxu0 0
    %203 = vmatprep.mubr.bf16.mxu0 0
    %204 = vmatmul.mubr.bf16.gmra.mrb[0].mxu0 %v121
    %v205 = vpop.f32.mrb[0].mxu0
    %v206 = vadd.f32 %v115, %v205
    %v207 = vpop.f32.mrb[0].mxu0
    %v208 = vpop.f32.mrb[0].mxu0
    %v209 = vadd.f32 %v115, %v208
    %v210 = vpop.f32.mrb[0].mxu0
    %211 = vdwg.mxu0
    %v212 = vmul.f32 %v206, 0.5
    %v213 = vmul.f32 %v209, 0.5
    %v214 = vmul.f32 %v206, 0.70710677
    %v215 = vmul.f32 %v209, 0.70710677
    %v216 = verf.f32.pop %v214
    %v217 = verf.f32.pop %v215
    %v218 = vadd.f32 %v216, 1.0
    %v219 = vadd.f32 %v217, 1.0
    %v220 = vmul.f32 %v212, %v218
    %v221 = vmul.f32 %v213, %v219
    %v222 = vld [vmem:[#allocation11] sm:$0xff]
    %v223 = vld [vmem:[#allocation11 + $0x8] sm:$0xff]
    %v224 = vpack.c.bf16 %v221, %v220
    %v225 = vld [vmem:[#allocation8] sm:$0xf]
    %v226 = vld [vmem:[#allocation8 + $0x4] sm:$0xf]
    %v227 = vld [vmem:[#allocation8 + $0x8] sm:$0xf]
    %v228 = vld [vmem:[#allocation8 + $0xc] sm:$0xf]
    %v229 = vld [vmem:[#allocation8 + $0x10] sm:$0xf]
    %v230 = vld [vmem:[#allocation8 + $0x14] sm:$0xf]
    %v231 = vld [vmem:[#allocation8 + $0x18] sm:$0xf]
    %v232 = vld [vmem:[#allocation8 + $0x1c] sm:$0xf]
    %v233 = vld [vmem:[#allocation8 + $0x20] sm:$0xf]
    %v234 = vld [vmem:[#allocation8 + $0x24] sm:$0xf]
    %v235 = vld [vmem:[#allocation8 + $0x28] sm:$0xf]
    %v236 = vld [vmem:[#allocation8 + $0x2c] sm:$0xf]
    %v237 = vld [vmem:[#allocation8 + $0x30] sm:$0xf]
    %v238 = vld [vmem:[#allocation8 + $0x34] sm:$0xf]
    %v239 = vld [vmem:[#allocation8 + $0x38] sm:$0xf]
    %v240 = vld [vmem:[#allocation8 + $0x3c] sm:$0xf]
    %v257 = vunpack.c.l.b16 %v225
    %v258 = vunpack.c.l.b16 %v226
    %v259 = vunpack.c.l.b16 %v227
    %v260 = vunpack.c.l.b16 %v228
    %v261 = vunpack.c.l.b16 %v229
    %v262 = vunpack.c.l.b16 %v230
    %v263 = vunpack.c.l.b16 %v231
    %v264 = vunpack.c.l.b16 %v232
    %v265 = vunpack.c.l.b16 %v233
    %v266 = vunpack.c.l.b16 %v234
    %v267 = vunpack.c.l.b16 %v235
    %v268 = vunpack.c.l.b16 %v236
    %v269 = vunpack.c.l.b16 %v237
    %v270 = vunpack.c.l.b16 %v238
    %v271 = vunpack.c.l.b16 %v239
    %v272 = vunpack.c.l.b16 %v240
    %v273 = vpack.c.b16 %v258, %v257
    %v274 = vpack.c.b16 %v260, %v259
    %v275 = vpack.c.b16 %v262, %v261
    %v276 = vpack.c.b16 %v264, %v263
    %v277 = vpack.c.b16 %v266, %v265
    %v278 = vpack.c.b16 %v268, %v267
    %v279 = vpack.c.b16 %v270, %v269
    %v280 = vpack.c.b16 %v272, %v271
    %289 = vmatprep.subr.bf16.mxu0 0
    %290 = vmatpush1.bf16.msra.mxu0 %v273
    %291 = vmatprep.subr.bf16.mxu0 0
    %292 = vmatpush1.bf16.msra.mxu0 %v274
    %293 = vmatprep.subr.bf16.mxu0 0
    %294 = vmatpush1.bf16.msra.mxu0 %v275
    %295 = vmatprep.subr.bf16.mxu0 0
    %296 = vmatpush1.bf16.msra.mxu0 %v276
    %297 = vmatprep.subr.bf16.mxu0 0
    %298 = vmatpush1.bf16.msra.mxu0 %v277
    %299 = vmatprep.subr.bf16.mxu0 0
    %300 = vmatpush1.bf16.msra.mxu0 %v278
    %301 = vmatprep.subr.bf16.mxu0 0
    %302 = vmatpush1.bf16.msra.mxu0 %v279
    %303 = vmatprep.subr.bf16.mxu0 0
    %304 = vmatpush1.bf16.msra.mxu0 %v280
    %305 = vmatprep.subr.bf16.mxu0 0
    %306 = vmatpush1.bf16.msra.mxu0 0
    %307 = vmatprep.subr.bf16.mxu0 0
    %308 = vmatpush1.bf16.msra.mxu0 0
    %309 = vmatprep.subr.bf16.mxu0 0
    %310 = vmatpush1.bf16.msra.mxu0 0
    %311 = vmatprep.subr.bf16.mxu0 0
    %312 = vmatpush1.bf16.msra.mxu0 0
    %313 = vmatprep.subr.bf16.mxu0 0
    %314 = vmatpush1.bf16.msra.mxu0 0
    %315 = vmatprep.subr.bf16.mxu0 0
    %316 = vmatpush1.bf16.msra.mxu0 0
    %317 = vmatprep.subr.bf16.mxu0 0
    %318 = vmatpush1.bf16.msra.mxu0 0
    %319 = vmatprep.subr.bf16.mxu0 0
    %320 = vmatpush1.bf16.msra.mxu0 0
    %321 = vmatprep.mubr.bf16.mxu0 0
    %322 = vmatmul.mubr.bf16.gmra.mrb[0].mxu0 %v224
    %v323 = vpop.f32.mrb[0].mxu0
    %v324 = vadd.f32 0.0, %v323
    %v325 = vpop.f32.mrb[0].mxu0
    %v326 = vpop.f32.mrb[0].mxu0
    %v327 = vadd.f32 0.0, %v326
    %v328 = vpop.f32.mrb[0].mxu0
    %329 = vdwg.mxu0
    %v330 = vadd.f32 %v222, %v324
    %v331 = vadd.f32 %v223, %v327
    %332 = vst [vmem:[#allocation11] sm:$0xff] %v330
    %333 = vst [vmem:[#allocation11 + $0x8] sm:$0xff] %v331
    // Predicated region
    $region46: #{mlp_pallas_prepared.1} parent=1 // pred_check
      %p334 = pneg %p86
    $region47: #{mlp_pallas_prepared.1} parent=1 // pred_check_branch
      %336 = sbr.rel (%p334) target = $region49
    $region48: #{mlp_pallas_prepared.1} parent=1 // pred_region
      %v337 = vld [vmem:[#allocation11] sm:$0xff]
      %v338 = vld [vmem:[#allocation11 + $0x8] sm:$0xff]
      %v339 = vld [vmem:[#allocation10] sm:$0x1]
      %v341 = vlaneseq
      %v342 = vshrl.u32 %v341, 7
      %v343 = vsub.s32 0, %v342
      %v344 = vrot.slane %v339, %v343
      %v346 = vadd.f32 %v337, %v344
      %v347 = vadd.f32 %v338, %v344
      %348 = vst [vmem:[#allocation11] sm:$0xff] %v346
      %349 = vst [vmem:[#allocation11 + $0x8] sm:$0xff] %v347
    $region49: #{mlp_pallas_prepared.1} parent=1 // pred_fallthru
      _
    // Predicated region
    $region50: #{mlp_pallas_prepared.1} parent=1 // pred_check
      _
    $region51: #{mlp_pallas_prepared.1} parent=1 // pred_check_branch
      %351 = sbr.rel (0) target = $region53
    $region52: #{mlp_pallas_prepared.1} parent=1 // pred_region
      %s353 = ssub.s32 256, 256
      %354 = vsyncadd [#allocation4], %s353
      %s355 = sshll.u32 [#allocation11], 4
      %s356 = int_to_ptr.vmem [resolvable:$true] %s355
      %361 = dma.vmem_to_hbm [thread:$0]  %s356, 256, %s5, [#allocation4], 128, 128, 8
    $region53: #{mlp_pallas_prepared.1} parent=1 // pred_fallthru
      _
    // Predicated region
    $region54: #{mlp_pallas_prepared.1} parent=1 // pred_check
      _
    $region55: #{mlp_pallas_prepared.1} parent=1 // pred_check_branch
      %363 = sbr.rel (0) target = $region57
    $region56: #{mlp_pallas_prepared.1} parent=1 // pred_region
      %364 = dma.done [#allocation4], 256
    $region57: #{mlp_pallas_prepared.1} parent=1 // pred_fallthru
      _
    %365 = vsyncpa [#allocation3], 1
    %366 = vsyncpa [#allocation6], 1
    %367 = vsyncpa [#allocation9], 1
    %368 = vsyncpa [#allocation4], 1

</llo_original>
